<compile_context>
chip_gen: v7x
topology: tpu7x:2x2x1
jax: 0.10.0
libtpu: 0.0.40
codegen_flags: <defaults>
</compile_context>

<pallas_src>
import jax
import jax.numpy as jnp
from jax.experimental import pallas as pl
from jax.experimental.pallas import tpu as pltpu


def _pa_kernel(x_ref, w1_ref, b1_ref, w2_ref, b2_ref, o_ref):
    # x_ref : (nb, C, T)  native dtype; channels on sublanes, pixels on lanes
    # w1_ref: (Cr, C) in x.dtype   b1_ref: (Cr, 1) f32
    # w2_ref: (Cr, 1) f32          b2_ref: (1,) f32 in SMEM
    w1 = w1_ref[...]
    b1 = b1_ref[...]
    w2 = w2_ref[...]
    b2 = b2_ref[0]

    nb = x_ref.shape[0]
    for n in range(nb):  # nb is small & static (only >1 for tiny images)
        xn = x_ref[n]                                      # (C, T), native dtype

        # conv1 (1x1): (Cr, C) @ (C, T) on the MXU, f32 accumulate, + bias, ReLU.
        h = jnp.dot(w1, xn, preferred_element_type=jnp.float32) + b1
        h = jnp.maximum(h, 0.0)

        # conv2 (1x1, single output channel): tiny K, N=1 -> VPU mul + sublane
        # reduce (XLU) instead of the MXU.
        s = jnp.sum(h * w2, axis=0, keepdims=True) + b2    # (1, T) f32
        y = jax.nn.sigmoid(s)

        # Pixel attention: broadcast per-pixel scalar across channels; the big
        # elementwise pass and the store stay in the input dtype.
        o_ref[n] = xn * y.astype(xn.dtype)


def _vmem_capacity_bytes():
    try:
        info = pltpu.get_tpu_info()
    except Exception:
        return 64 << 20  # conservative (v7x per-TC) fallback
    for name in ("vmem_capacity_bytes", "vmem_bytes", "vmem_size_bytes"):
        v = getattr(info, name, None)
        if v:
            return int(v)
    return 64 << 20


def _select_tiling(N, C, HW, itemsize, vmem_cap):
    """Return (nb, t, vmem_limit): batch-block, pixel-tile, vmem limit bytes."""
    if vmem_cap >= (100 << 20):          # 128 MiB parts: v5e / v6e
        vmem_limit = 96 << 20
        tile_target = 2 << 20            # ~2 MiB x tiles -> >=85% HBM roofline
    else:                                # 64 MiB parts: v7x (per TC)
        vmem_limit = 44 << 20
        tile_target = 4 << 20            # faster HBM -> bigger tiles to amortize
    headroom = 4 << 20
    # ~6 tile-sized live buffers: 2x2 double-buffered in/out + ~2 temporaries.
    tile_budget = max(128 * C * itemsize, (vmem_limit - headroom) // 6)

    per_image = C * HW * itemsize
    if N > 1 and per_image * 2 <= tile_target:
        # Small-image path: full spatial extent, block several batch elements.
        t = HW
        nb = max(1, min(N, tile_target // max(per_image, 1)))
        while N % nb:                    # nb must divide N (no masked batch tail)
            nb -= 1
        while nb > 1 and (N // nb) < 2:  # keep >= 2 grid steps (dual TCs)
            nb //= 2
            while N % nb:
                nb -= 1
        return nb, t, vmem_limit

    nb = 1
    if HW < 128:
        return nb, HW, vmem_limit        # full-extent lane block

    t = min(tile_target, tile_budget) // (C * itemsize)
    t = max(128, (min(t, HW) // 128) * 128)
    # Prefer a t that divides HW -> last tile is unmasked (lane-dense vst).
    if HW % 128 == 0 and HW % t:
        cand = t
        while cand > 128 and HW % cand:
            cand -= 128
        if HW % cand == 0:
            t = cand
    # Guarantee at least 2 total grid steps so both v7x TCs get work.
    if N * (-(-HW // t)) < 2 and HW >= 256:
        t = max(128, ((HW // 2) // 128) * 128)
    return nb, t, vmem_limit


def pa_layer(x, w1, b1, w2, b2):
    """x: (N, C, H, W).  w1: (C//8, C), b1: (C//8,), w2: (1, C//8), b2: (1,)."""
    N, C, H, W = x.shape
    Cr = w1.shape[0]
    HW = H * W
    itemsize = x.dtype.itemsize

    # Native NCHW layout: view as (N, C, H*W); pixels land on the 128-lane axis.
    x3d = x.reshape(N, C, HW)

    nb, t, vmem_limit = _select_tiling(N, C, HW, itemsize, _vmem_capacity_bytes())
    grid = (N // nb, pl.cdiv(HW, t))

    # Small parameters, shaped for in-kernel broadcasting.
    w1_k = w1.astype(x.dtype)                      # MXU operand in x's dtype
    b1_k = b1.reshape(Cr, 1).astype(jnp.float32)
    w2_k = w2.reshape(Cr, 1).astype(jnp.float32)   # (1, Cr) -> column
    b2_k = b2.reshape(1).astype(jnp.float32)       # scalar, kept in SMEM

    out3d = pl.pallas_call(
        _pa_kernel,
        out_shape=jax.ShapeDtypeStruct((N, C, HW), x.dtype),
        grid=grid,
        in_specs=[
            pl.BlockSpec((nb, C, t), lambda b, i: (b, 0, i)),   # x tile
            pl.BlockSpec((Cr, C), lambda b, i: (0, 0)),         # w1 (whole)
            pl.BlockSpec((Cr, 1), lambda b, i: (0, 0)),         # b1 column
            pl.BlockSpec((Cr, 1), lambda b, i: (0, 0)),         # w2 column
            pl.BlockSpec(memory_space=pltpu.MemorySpace.SMEM),  # b2 scalar
        ],
        out_specs=pl.BlockSpec((nb, C, t), lambda b, i: (b, 0, i)),
        compiler_params=pltpu.CompilerParams(
            dimension_semantics=("parallel", "parallel"),
            vmem_limit_bytes=int(vmem_limit),
        ),
    )(x3d, w1_k, b1_k, w2_k, b2_k)

    return out3d.reshape(N, C, H, W)


def _reference(x, w1, b1, w2, b2):
    # Pure-JAX reference replicating the PyTorch forward exactly (NCHW).
    h = jnp.maximum(
        jnp.einsum('nchw,oc->nohw', x, w1) + b1[None, :, None, None], 0.0)
    y = jax.nn.sigmoid(
        jnp.einsum('nohw,ro->nrhw', h, w2) + b2[None, :, None, None])
    return x * y


if __name__ == "__main__":
    key = jax.random.PRNGKey(0)
    N, C, H, W = 2, 16, 16, 16           # channel must be a multiple of 8
    Cr = C // 8

    kx, k1, k2, k3, k4 = jax.random.split(key, 5)
    x = jax.random.normal(kx, (N, C, H, W), dtype=jnp.float32)

    # Deterministic parameter init (1x1 conv weight/bias shapes).
    w1 = jax.random.normal(k1, (Cr, C), dtype=jnp.float32) * 0.1   # Conv2d(C, C//8, 1)
    b1 = jax.random.normal(k2, (Cr,), dtype=jnp.float32) * 0.1
    w2 = jax.random.normal(k3, (1, Cr), dtype=jnp.float32) * 0.1   # Conv2d(C//8, 1, 1)
    b2 = jax.random.normal(k4, (1,), dtype=jnp.float32) * 0.1

    out = pa_layer(x, w1, b1, w2, b2)
    out = jax.block_until_ready(out)

    ref = _reference(x, w1, b1, w2, b2)
    assert out.shape == x.shape
    assert jnp.allclose(out, ref, atol=1e-5, rtol=1e-5), "mismatch vs reference"

    print("KERNEL_OK")
</pallas_src>

<mosaic_0001>
module attributes {stable_mosaic.version = 11 : i64} {
  func.func @_pa_kernel(%arg0: i32, %arg1: i32, %arg2: memref<1x16x256xf32, #tpu.memory_space<vmem>>, %arg3: memref<2x16xf32, #tpu.memory_space<vmem>>, %arg4: memref<2x1xf32, #tpu.memory_space<vmem>>, %arg5: memref<2x1xf32, #tpu.memory_space<vmem>>, %arg6: memref<1xf32, #tpu.memory_space<smem>>, %arg7: memref<1x16x256xf32, #tpu.memory_space<vmem>>) attributes {dimension_semantics = [#tpu.dimension_semantics<parallel>, #tpu.dimension_semantics<parallel>], iteration_bounds = array<i64: 2, 1>, scalar_prefetch = 0 : i64, scratch_operands = 0 : i64, tpu.core_type = #tpu.core_type<tc>, window_params = [{transform_indices = @transform_0, window_bounds = array<i64: 1, 16, 256>}, {pipeline_mode = #tpu.pipeline_mode<synchronous>, transform_indices = @transform_1, window_bounds = array<i64: 2, 16>}, {pipeline_mode = #tpu.pipeline_mode<synchronous>, transform_indices = @transform_2, window_bounds = array<i64: 2, 1>}, {pipeline_mode = #tpu.pipeline_mode<synchronous>, transform_indices = @transform_3, window_bounds = array<i64: 2, 1>}, {transform_indices = @transform_4, window_bounds = array<i64: 1>}, {transform_indices = @transform_5, window_bounds = array<i64: 1, 16, 256>}]} {
    %c0 = arith.constant 0 : index
    %c0_0 = arith.constant 0 : index
    %0 = vector.load %arg3[%c0, %c0_0] : memref<2x16xf32, #tpu.memory_space<vmem>>, vector<2x16xf32>
    %c0_1 = arith.constant 0 : index
    %c0_2 = arith.constant 0 : index
    %1 = vector.load %arg4[%c0_1, %c0_2] : memref<2x1xf32, #tpu.memory_space<vmem>>, vector<2x1xf32>
    %c0_3 = arith.constant 0 : index
    %c0_4 = arith.constant 0 : index
    %2 = vector.load %arg5[%c0_3, %c0_4] : memref<2x1xf32, #tpu.memory_space<vmem>>, vector<2x1xf32>
    %c0_5 = arith.constant 0 : index
    %3 = memref.load %arg6[%c0_5] : memref<1xf32, #tpu.memory_space<smem>>
    %c0_6 = arith.constant 0 : index
    %c0_7 = arith.constant 0 : index
    %c0_8 = arith.constant 0 : index
    %4 = vector.load %arg2[%c0_6, %c0_7, %c0_8] : memref<1x16x256xf32, #tpu.memory_space<vmem>>, vector<1x16x256xf32>
    %5 = vector.shape_cast %4 : vector<1x16x256xf32> to vector<16x256xf32>
    %cst = arith.constant dense<0.000000e+00> : vector<2x256xf32>
    %6 = tpu.matmul %0, %5, %cst {dimension_numbers = #tpu.dot_dimension_numbers<[1], [0], [0], [1], [0, 0, 1, 1], [], []>} : vector<2x16xf32>, vector<16x256xf32>, vector<2x256xf32> -> vector<2x256xf32>
    %7 = vector.broadcast %1 : vector<2x1xf32> to vector<2x256xf32>
    %8 = arith.addf %6, %7 : vector<2x256xf32>
    %cst_9 = arith.constant 0.000000e+00 : f32
    %9 = vector.broadcast %cst_9 : f32 to vector<2x256xf32>
    %10 = arith.maximumf %8, %9 : vector<2x256xf32>
    %11 = vector.broadcast %2 : vector<2x1xf32> to vector<2x256xf32>
    %12 = arith.mulf %10, %11 : vector<2x256xf32>
    %cst_10 = arith.constant dense<0.000000e+00> : vector<256xf32>
    %13 = vector.multi_reduction <add>, %12, %cst_10 [0] : vector<2x256xf32> to vector<256xf32>
    %14 = vector.shape_cast %13 : vector<256xf32> to vector<1x256xf32>
    %15 = vector.broadcast %3 : f32 to vector<1x256xf32>
    %16 = arith.addf %14, %15 : vector<1x256xf32>
    %17 = arith.negf %16 : vector<1x256xf32>
    %18 = math.exp %17 : vector<1x256xf32>
    %cst_11 = arith.constant 1.000000e+00 : f32
    %19 = vector.broadcast %cst_11 : f32 to vector<1x256xf32>
    %20 = arith.addf %19, %18 : vector<1x256xf32>
    %21 = arith.divf %19, %20 : vector<1x256xf32>
    %22 = vector.broadcast %21 : vector<1x256xf32> to vector<16x256xf32>
    %23 = arith.mulf %5, %22 : vector<16x256xf32>
    %c0_12 = arith.constant 0 : index
    %c0_13 = arith.constant 0 : index
    %c0_14 = arith.constant 0 : index
    %24 = vector.load %arg7[%c0_12, %c0_13, %c0_14] : memref<1x16x256xf32, #tpu.memory_space<vmem>>, vector<1x16x256xf32>
    %25 = vector.shape_cast %24 : vector<1x16x256xf32> to vector<16x256xf32>
    %26 = vector.shape_cast %23 : vector<16x256xf32> to vector<1x16x256xf32>
    tpu.vector_store %arg7[%c0_12, %c0_13, %c0_14], %26 {strides = array<i32>} : memref<1x16x256xf32, #tpu.memory_space<vmem>>, vector<1x16x256xf32>,
    return
  }
  func.func @transform_0(%arg0: i32, %arg1: i32) -> (i32, i32, i32) {
    %c0_i32 = arith.constant 0 : i32
    %c0_i32_0 = arith.constant 0 : i32
    return %arg0, %c0_i32, %arg1 : i32, i32, i32
  }
  func.func @transform_1(%arg0: i32, %arg1: i32) -> (i32, i32) {
    %c0_i32 = arith.constant 0 : i32
    %c0_i32_0 = arith.constant 0 : i32
    %c0_i32_1 = arith.constant 0 : i32
    return %c0_i32, %c0_i32_0 : i32, i32
  }
  func.func @transform_2(%arg0: i32, %arg1: i32) -> (i32, i32) {
    %c0_i32 = arith.constant 0 : i32
    %c0_i32_0 = arith.constant 0 : i32
    %c0_i32_1 = arith.constant 0 : i32
    return %c0_i32, %c0_i32_0 : i32, i32
  }
  func.func @transform_3(%arg0: i32, %arg1: i32) -> (i32, i32) {
    %c0_i32 = arith.constant 0 : i32
    %c0_i32_0 = arith.constant 0 : i32
    %c0_i32_1 = arith.constant 0 : i32
    return %c0_i32, %c0_i32_0 : i32, i32
  }
  func.func @transform_4(%arg0: i32, %arg1: i32) -> i32 {
    %c0_i32 = arith.constant 0 : i32
    %c0_i32_0 = arith.constant 0 : i32
    return %c0_i32 : i32
  }
  func.func @transform_5(%arg0: i32, %arg1: i32) -> (i32, i32, i32) {
    %c0_i32 = arith.constant 0 : i32
    %c0_i32_0 = arith.constant 0 : i32
    return %arg0, %c0_i32, %arg1 : i32, i32, i32
  }
}

</mosaic_0001>

<llo_original>
// kernel: tpu_custom_call.1
$region0: #{tpu_custom_call.1}
  #allocation0 [shape = 'u32[]', space=smem, size = 0x4, offset = 0x4, fixed_abs, tag = 'smem constant byte address 0x4 - core index']
  #allocation1 [shape = 'u32[144,128]{1,0:T(1,128)}', space=vmem, size = 0x12000, scoped, tag = 'internal scratch']
  #allocation2 [shape = 'f32[1]{0:T(128)S(6)}', space=smem, size = 0x200, scoped, tag = 'scoped memory for tpu_custom_call.1']
  %s0 = inlined_call_operand.hbm [shape: f32[2,16,256], index: 0, kind: input, shape index: {}]
  %s1 = inlined_call_operand.vmem [shape: f32[2,16], index: 1, kind: input, shape index: {}]
  %s2 = inlined_call_operand.vmem [shape: f32[2,1], index: 2, kind: input, shape index: {}]
  %s3 = inlined_call_operand.vmem [shape: f32[2,1], index: 3, kind: input, shape index: {}]
  %s4 = inlined_call_operand.<no memory space> [shape: f32[1], index: 4, kind: input, shape index: {}]
  %s5 = inlined_call_operand.hbm [shape: f32[2,16,256], index: 5, kind: output, shape index: {}]
  %s6 = sld [smem:[#allocation0]]
  $region57: #{tpu_custom_call.1} parent=0
    _
  %s8 = ssub.s32 1, %s6
  %s9 = scalar_select 0, %s8, %s6
  %10 = sst [smem:[#allocation2]] %s4
  $region1: #{tpu_custom_call.1} parent=0
    #allocation3 [shape = 'u8[32768]{0}', space=vmem, size = 0x8000, scoped, tag = 'input window, operand 0']
    #allocation4 [shape = 's32[2]{0}', space=sflag, size = 0x8, scoped, tag = 'scoped memory for tpu_custom_call.1']
    #allocation5 [shape = 's32[2]{0}', space=sflag, size = 0x8, scoped, tag = 'scoped memory for tpu_custom_call.1']
    #allocation6 [shape = 'u8[32768]{0}', space=vmem, size = 0x8000, scoped, tag = 'output window, operand 0']
    %11 = vsyncpa [#allocation4], 0
    %s12 = scalar_lea.sflag [#allocation4], 1
    %13 = vsyncpa %s12, 0
    %14 = vsyncpa [#allocation5], 0
    %s15 = scalar_lea.sflag [#allocation5], 1
    %16 = vsyncpa %s15, 0
    loop: start=0, step=1, limit=4
    $region2: #{tpu_custom_call.1} parent=1 // loop_pre_header
      _
    $region3: #{tpu_custom_call.1} parent=1 // loop_header
      %s18 = sphi 0, %s22
      %p19 = scmp.ge.s32.totalorder %s18, 4
      %s25 = sphi 0, %s37
      %s26 = sphi 0, %s33
      %s27 = sphi 0, %s25
      %s28 = sphi 0, %s26
      %s29 = sphi 0, %s27
      %s30 = sphi 0, %s28
      %s42 = sphi 0, %s44
      %s45 = sphi 0, %s42
      %s46 = sphi 0, %s45
      %s62 = sphi 0, %s46
      %s66 = sphi 0, %s66
      %s68 = sphi 0, %s66
      %s69 = sphi 0, %s68
      %s83 = sphi 0, %s69
      %s87 = sphi 0, %s87
      %s89 = sphi 0, %s87
      %s90 = sphi 0, %s89
      %s104 = sphi 0, %s90
      %s108 = sphi 0, %s108
      %s110 = sphi 0, %s108
      %s111 = sphi 0, %s110
      %s125 = sphi 0, %s111
      %s129 = sphi 0, %s129
      %s131 = sphi 0, %s129
      %s132 = sphi 0, %s131
      %s146 = sphi 0, %s132
      %s154 = sphi 0, %s156
      %s157 = sphi 0, %s154
      %s158 = sphi 0, %s157
      %s174 = sphi 0, %s158
    $region4: #{tpu_custom_call.1} parent=1 // loop_header_branch
      %21 = sbr.rel (%p19) target = $region8
    $region5: #{tpu_custom_call.1} parent=1 // loop_body
      %s23 = ssub.s32 %s18, 1
      %s24 = ssub.s32 %s18, 2
      %s31 = sadd.s32 1, %s26
      %p32 = scmp.ge.s32.totalorder %s31, 1
      %s33 = scalar_select %p32, 0, %s31
      %s34 = sadd.s32 1, %s25
      %s35 = scalar_select %p32, %s34, %s25
      %p36 = scmp.ge.s32.totalorder %s35, 2
      %s37 = scalar_select %p36, 0, %s35
      %s38 = ssub.s32 %s25, %s37
      %s39 = ssub.s32 %s26, %s33
      %s40 = sor.u32 %s38, %s39
      %p41 = scmp.eq.s32.totalorder %s40, 0
      %s43 = sadd.s32 %s42, 1
      %s44 = scalar_select %p41, %s42, %s43
      %p47 = pneg %p41
      %p48 = scmp.eq.s32.totalorder %s18, 1
      %p49 = por %p47, %p48
      %p50 = scmp.ne.s32.totalorder %s42, %s45
      %p51 = scmp.eq.s32.totalorder %s18, 0
      %p52 = por %p50, %p51
      %p53 = scmp.ne.s32.totalorder %s42, %s45
      %p54 = scmp.eq.s32.totalorder %s23, 1
      %p55 = por %p53, %p54
      %p56 = scmp.ne.s32.totalorder %s45, %s46
      %p57 = scmp.eq.s32.totalorder %s23, 0
      %p58 = por %p56, %p57
      %p59 = scmp.ne.s32.totalorder %s45, %s46
      %p60 = scmp.eq.s32.totalorder %s24, 1
      %p61 = por %p59, %p60
      %p63 = scmp.ne.s32.totalorder %s46, %s62
      %p64 = scmp.eq.s32.totalorder %s24, 0
      %p65 = por %p63, %p64
      %s67 = sadd.s32 %s66, 1
      %p70 = scmp.eq.s32.totalorder %s18, 1
      %p71 = scmp.ne.s32.totalorder %s66, %s68
      %p72 = scmp.eq.s32.totalorder %s18, 0
      %p73 = por %p71, %p72
      %p74 = scmp.ne.s32.totalorder %s66, %s68
      %p75 = scmp.eq.s32.totalorder %s23, 1
      %p76 = por %p74, %p75
      %p77 = scmp.ne.s32.totalorder %s68, %s69
      %p78 = scmp.eq.s32.totalorder %s23, 0
      %p79 = por %p77, %p78
      %p80 = scmp.ne.s32.totalorder %s68, %s69
      %p81 = scmp.eq.s32.totalorder %s24, 1
      %p82 = por %p80, %p81
      %p84 = scmp.ne.s32.totalorder %s69, %s83
      %p85 = scmp.eq.s32.totalorder %s24, 0
      %p86 = por %p84, %p85
      %s88 = sadd.s32 %s87, 1
      %p91 = scmp.eq.s32.totalorder %s18, 1
      %p92 = scmp.ne.s32.totalorder %s87, %s89
      %p93 = scmp.eq.s32.totalorder %s18, 0
      %p94 = por %p92, %p93
      %p95 = scmp.ne.s32.totalorder %s87, %s89
      %p96 = scmp.eq.s32.totalorder %s23, 1
      %p97 = por %p95, %p96
      %p98 = scmp.ne.s32.totalorder %s89, %s90
      %p99 = scmp.eq.s32.totalorder %s23, 0
      %p100 = por %p98, %p99
      %p101 = scmp.ne.s32.totalorder %s89, %s90
      %p102 = scmp.eq.s32.totalorder %s24, 1
      %p103 = por %p101, %p102
      %p105 = scmp.ne.s32.totalorder %s90, %s104
      %p106 = scmp.eq.s32.totalorder %s24, 0
      %p107 = por %p105, %p106
      %s109 = sadd.s32 %s108, 1
      %p112 = scmp.eq.s32.totalorder %s18, 1
      %p113 = scmp.ne.s32.totalorder %s108, %s110
      %p114 = scmp.eq.s32.totalorder %s18, 0
      %p115 = por %p113, %p114
      %p116 = scmp.ne.s32.totalorder %s108, %s110
      %p117 = scmp.eq.s32.totalorder %s23, 1
      %p118 = por %p116, %p117
      %p119 = scmp.ne.s32.totalorder %s110, %s111
      %p120 = scmp.eq.s32.totalorder %s23, 0
      %p121 = por %p119, %p120
      %p122 = scmp.ne.s32.totalorder %s110, %s111
      %p123 = scmp.eq.s32.totalorder %s24, 1
      %p124 = por %p122, %p123
      %p126 = scmp.ne.s32.totalorder %s111, %s125
      %p127 = scmp.eq.s32.totalorder %s24, 0
      %p128 = por %p126, %p127
      %s130 = sadd.s32 %s129, 1
      %p133 = scmp.eq.s32.totalorder %s18, 1
      %p134 = scmp.ne.s32.totalorder %s129, %s131
      %p135 = scmp.eq.s32.totalorder %s18, 0
      %p136 = por %p134, %p135
      %p137 = scmp.ne.s32.totalorder %s129, %s131
      %p138 = scmp.eq.s32.totalorder %s23, 1
      %p139 = por %p137, %p138
      %p140 = scmp.ne.s32.totalorder %s131, %s132
      %p141 = scmp.eq.s32.totalorder %s23, 0
      %p142 = por %p140, %p141
      %p143 = scmp.ne.s32.totalorder %s131, %s132
      %p144 = scmp.eq.s32.totalorder %s24, 1
      %p145 = por %p143, %p144
      %p147 = scmp.ne.s32.totalorder %s132, %s146
      %p148 = scmp.eq.s32.totalorder %s24, 0
      %p149 = por %p147, %p148
      %s150 = ssub.s32 %s25, %s37
      %s151 = ssub.s32 %s26, %s33
      %s152 = sor.u32 %s150, %s151
      %p153 = scmp.eq.s32.totalorder %s152, 0
      %s155 = sadd.s32 %s154, 1
      %s156 = scalar_select %p153, %s154, %s155
      %p159 = pneg %p153
      %p160 = scmp.eq.s32.totalorder %s18, 1
      %p161 = por %p159, %p160
      %p162 = scmp.ne.s32.totalorder %s154, %s157
      %p163 = scmp.eq.s32.totalorder %s18, 0
      %p164 = por %p162, %p163
      %p165 = scmp.ne.s32.totalorder %s154, %s157
      %p166 = scmp.eq.s32.totalorder %s23, 1
      %p167 = por %p165, %p166
      %p168 = scmp.ne.s32.totalorder %s157, %s158
      %p169 = scmp.eq.s32.totalorder %s23, 0
      %p170 = por %p168, %p169
      %p171 = scmp.ne.s32.totalorder %s157, %s158
      %p172 = scmp.eq.s32.totalorder %s24, 1
      %p173 = por %p171, %p172
      %p175 = scmp.ne.s32.totalorder %s158, %s174
      %p176 = scmp.eq.s32.totalorder %s24, 0
      %p177 = por %p175, %p176
      %p178 = scmp.le.s32.totalorder 1, %s18
      %p179 = scmp.lt.s32.totalorder %s18, 3
      %p180 = pnand %p178, %p179
      %p181 = pneg %p180
      // Predicated region
      $region9: #{tpu_custom_call.1} parent=5 // pred_check
        _
      $region10: #{tpu_custom_call.1} parent=5 // pred_check_branch
        %183 = sbr.rel (%p180) target = $region12
      $region11: #{tpu_custom_call.1} parent=5 // pred_region
        %s184 = ssub.s32 %s18, 1
        // Predicated region
        $region13: #{tpu_custom_call.1} parent=11 // pred_check
          %p185 = pneg %p79
        $region14: #{tpu_custom_call.1} parent=11 // pred_check_branch
          %187 = sbr.rel (%p185) target = $region16
        $region15: #{tpu_custom_call.1} parent=11 // pred_region
          _
        $region16: #{tpu_custom_call.1} parent=11 // pred_fallthru
          _
        // Predicated region
        $region17: #{tpu_custom_call.1} parent=11 // pred_check
          %p188 = pneg %p100
        $region18: #{tpu_custom_call.1} parent=11 // pred_check_branch
          %190 = sbr.rel (%p188) target = $region20
        $region19: #{tpu_custom_call.1} parent=11 // pred_region
          _
        $region20: #{tpu_custom_call.1} parent=11 // pred_fallthru
          _
        // Predicated region
        $region21: #{tpu_custom_call.1} parent=11 // pred_check
          %p191 = pneg %p121
        $region22: #{tpu_custom_call.1} parent=11 // pred_check_branch
          %193 = sbr.rel (%p191) target = $region24
        $region23: #{tpu_custom_call.1} parent=11 // pred_region
          _
        $region24: #{tpu_custom_call.1} parent=11 // pred_fallthru
          _
        // Predicated region
        $region25: #{tpu_custom_call.1} parent=11 // pred_check
          %p194 = pneg %p142
        $region26: #{tpu_custom_call.1} parent=11 // pred_check_branch
          %196 = sbr.rel (%p194) target = $region28
        $region27: #{tpu_custom_call.1} parent=11 // pred_region
          _
        $region28: #{tpu_custom_call.1} parent=11 // pred_fallthru
          _
      $region12: #{tpu_custom_call.1} parent=5 // pred_fallthru
        _
      %p197 = scmp.lt.s32.totalorder %s18, 2
      // Predicated region
      $region29: #{tpu_custom_call.1} parent=5 // pred_check
        %p198 = pneg %p197
      $region30: #{tpu_custom_call.1} parent=5 // pred_check_branch
        %200 = sbr.rel (%p198) target = $region32
      $region31: #{tpu_custom_call.1} parent=5 // pred_region
        // Predicated region
        $region33: #{tpu_custom_call.1} parent=31 // pred_check
          %p201 = pneg %p52
        $region34: #{tpu_custom_call.1} parent=31 // pred_check_branch
          %203 = sbr.rel (%p201) target = $region36
        $region35: #{tpu_custom_call.1} parent=31 // pred_region
          %s204 = sand.u32 %s42, 1
          %s205 = scalar_lea.sflag [#allocation4], %s204
          %s206 = sand.u32 %s42, 1
          %s207 = smul.addr %s206, 32
          %s208 = scalar_lea.vmem [#allocation3], %s207
          %s209 = smul.u32 2, %s26
          %s211 = ssub.s32 512, 512
          %212 = vsyncadd %s205, %s211
          %s213 = smul.addr %s25, 4
          %s214 = sadd.s32 %s209, %s213
          %s215 = smul.addr %s214, 128
          %s216 = scalar_lea.hbm %s0, %s215
          %s217 = sshll.u32 %s208, 4
          %s218 = int_to_ptr.vmem [resolvable:$true] %s217
          %223 = dma.hbm_to_vmem [thread:$0]  %s216, 512, %s218, %s205, 256, 256, 16
        $region36: #{tpu_custom_call.1} parent=31 // pred_fallthru
          _
      $region32: #{tpu_custom_call.1} parent=5 // pred_fallthru
        _
      %p224 = scmp.le.s32.totalorder 1, %s18
      %p225 = scmp.lt.s32.totalorder %s18, 3
      %p226 = pnand %p224, %p225
      %p227 = pneg %p226
      // Predicated region
      $region37: #{tpu_custom_call.1} parent=5 // pred_check
        _
      $region38: #{tpu_custom_call.1} parent=5 // pred_check_branch
        %229 = sbr.rel (%p226) target = $region40
      $region39: #{tpu_custom_call.1} parent=5 // pred_region
        %s230 = ssub.s32 %s18, 1
        %s231 = sand.u32 %s45, 1
        %s232 = scalar_lea.sflag [#allocation4], %s231
        %s233 = sand.u32 %s45, 1
        %s234 = smul.addr %s233, 32
        %s235 = scalar_lea.vmem [#allocation3], %s234
        // Predicated region
        $region41: #{tpu_custom_call.1} parent=39 // pred_check
          %p236 = pneg %p58
        $region42: #{tpu_custom_call.1} parent=39 // pred_check_branch
          %238 = sbr.rel (%p236) target = $region44
        $region43: #{tpu_custom_call.1} parent=39 // pred_region
          %239 = dma.done %s232, 512
        $region44: #{tpu_custom_call.1} parent=39 // pred_fallthru
          _
        %s240 = sand.u32 %s45, 1
        %s241 = scalar_lea.sflag [#allocation4], %s240
        %s242 = sand.u32 %s45, 1
        %s243 = smul.addr %s242, 32
        %s244 = scalar_lea.vmem [#allocation3], %s243
        %p245 = pneg %p58
        %p246 = pneg %p55
        %p247 = pneg %p79
        %p248 = pneg %p76
        %p249 = pneg %p100
        %p250 = pneg %p97
        %p251 = pneg %p121
        %p252 = pneg %p118
        %p253 = pneg %p142
        %p254 = pneg %p139
        %p255 = pneg %p170
        %p256 = pneg %p167
        %s257 = sand.u32 %s157, 1
        %s258 = scalar_lea.sflag [#allocation5], %s257
        %s259 = sand.u32 %s157, 1
        %s260 = smul.addr %s259, 32
        %s261 = scalar_lea.vmem [#allocation6], %s260
        %s262 = smul.u32 2, %s28
        %s263 = smul.u32 2, %s28
        %v264 = vld [vmem:[%s1] sm:$0x3]
        %v265 = vld [vmem:[%s2] sm:$0x3]
        %v266 = vld [vmem:[%s3] sm:$0x3]
        %s267 = sld [smem:[#allocation2]]
        %v268 = vld [vmem:[%s235] sm:$0xff]
        %v269 = vld [vmem:[%s235 + $0x8] sm:$0xff]
        %v270 = vld [vmem:[%s235 + $0x10] sm:$0xff]
        %v271 = vld [vmem:[%s235 + $0x18] sm:$0xff]
        %273 = vset.pattern.permute.xlu0 0
        %274 = vperm.xlu0 %273, %v265
        %v275 = vpop.permute.xlu0 %274
        %vm277 = vcmask 130048
        %v279 = vsel %vm277, %v264, 0
        %281 = vmatprep.subr.mxu0 %v269
        %282 = vmatpush1.msra.mxu0 %v268
        %283 = vmatprep.subr.mxu0 %v271
        %284 = vmatpush1.msra.mxu0 %v270
        %285 = vmatprep.subr.mxu0 0.0
        %286 = vmatpush1.msra.mxu0 0.0
        %287 = vmatprep.subr.mxu0 0.0
        %288 = vmatpush1.msra.mxu0 0.0
        %289 = vmatprep.subr.mxu0 0.0
        %290 = vmatpush1.msra.mxu0 0.0
        %291 = vmatprep.subr.mxu0 0.0
        %292 = vmatpush1.msra.mxu0 0.0
        %293 = vmatprep.subr.mxu0 0.0
        %294 = vmatpush1.msra.mxu0 0.0
        %295 = vmatprep.subr.mxu0 0.0
        %296 = vmatpush1.msra.mxu0 0.0
        %297 = vmatprep.subr.mxu0 0.0
        %298 = vmatpush1.msra.mxu0 0.0
        %299 = vmatprep.subr.mxu0 0.0
        %300 = vmatpush1.msra.mxu0 0.0
        %301 = vmatprep.subr.mxu0 0.0
        %302 = vmatpush1.msra.mxu0 0.0
        %303 = vmatprep.subr.mxu0 0.0
        %304 = vmatpush1.msra.mxu0 0.0
        %305 = vmatprep.subr.mxu0 0.0
        %306 = vmatpush1.msra.mxu0 0.0
        %307 = vmatprep.subr.mxu0 0.0
        %308 = vmatpush1.msra.mxu0 0.0
        %309 = vmatprep.subr.mxu0 0.0
        %310 = vmatpush1.msra.mxu0 0.0
        %311 = vmatprep.subr.mxu0 0.0
        %312 = vmatpush1.msra.mxu0 0.0
        %313 = vmatprep.subr.mxu0 0.0
        %314 = vmatpush1.msra.mxu0 0.0
        %315 = vmatprep.subr.mxu0 0.0
        %316 = vmatpush1.msra.mxu0 0.0
        %317 = vmatprep.subr.mxu0 0.0
        %318 = vmatpush1.msra.mxu0 0.0
        %319 = vmatprep.subr.mxu0 0.0
        %320 = vmatpush1.msra.mxu0 0.0
        %321 = vmatprep.subr.mxu0 0.0
        %322 = vmatpush1.msra.mxu0 0.0
        %323 = vmatprep.subr.mxu0 0.0
        %324 = vmatpush1.msra.mxu0 0.0
        %325 = vmatprep.subr.mxu0 0.0
        %326 = vmatpush1.msra.mxu0 0.0
        %327 = vmatprep.subr.mxu0 0.0
        %328 = vmatpush1.msra.mxu0 0.0
        %329 = vmatprep.subr.mxu0 0.0
        %330 = vmatpush1.msra.mxu0 0.0
        %331 = vmatprep.subr.mxu0 0.0
        %332 = vmatpush1.msra.mxu0 0.0
        %333 = vmatprep.subr.mxu0 0.0
        %334 = vmatpush1.msra.mxu0 0.0
        %335 = vmatprep.subr.mxu0 0.0
        %336 = vmatpush1.msra.mxu0 0.0
        %337 = vmatprep.subr.mxu0 0.0
        %338 = vmatpush1.msra.mxu0 0.0
        %339 = vmatprep.subr.mxu0 0.0
        %340 = vmatpush1.msra.mxu0 0.0
        %341 = vmatprep.subr.mxu0 0.0
        %342 = vmatpush1.msra.mxu0 0.0
        %343 = vmatprep.subr.mxu0 0.0
        %344 = vmatpush1.msra.mxu0 0.0
        %345 = vmatprep.mubr.f32.mxu0 0.0
        %346 = vmatmul.mubr.f32.gmra.mrb[0].mxu0 %v279
        %v347 = vpop.f32.mrb[0].mxu0
        %v348 = vadd.f32 %v275, %v347
        %v349 = vpop.f32.mrb[0].mxu0
        %v350 = vadd.f32 %v275, %v349
        %351 = vdwg.mxu0
        %v352 = vmax.f32 %v348, 0.0
        %v353 = vmax.f32 %v350, 0.0
        %355 = vset.pattern.permute.xlu0 0
        %356 = vperm.xlu0 %355, %v266
        %v357 = vpop.permute.xlu0 %356
        %v359 = vmul.f32 %v352, %v357
        %v360 = vmul.f32 %v353, %v357
        %vm361 = vcmask 1041408
        %v362 = vsel %vm361, %v359, 0.0
        %v363 = vrot.slane %v362, 4
        %v364 = vadd.f32 %v362, %v363
        %v365 = vrot.slane %v364, 2
        %v366 = vadd.f32 %v364, %v365
        %v367 = vrot.slane %v366, 1
        %v368 = vadd.f32 %v366, %v367
        %v369 = vsel %vm361, %v360, 0.0
        %v370 = vrot.slane %v369, 4
        %v371 = vadd.f32 %v369, %v370
        %v372 = vrot.slane %v371, 2
        %v373 = vadd.f32 %v371, %v372
        %v374 = vrot.slane %v373, 1
        %v375 = vadd.f32 %v373, %v374
        %v376 = vstv %s267
        %v377 = vadd.f32 %v368, %v376
        %v378 = vadd.f32 %v375, %v376
        %v379 = vxor.u32 %v377, 2147483648
        %v380 = vxor.u32 %v378, 2147483648
        %v381 = vmul.f32 %v379, 1.442695
        %v382 = vpow.pop %v381
        %v383 = vmul.f32 %v380, 1.442695
        %v384 = vpow.pop %v383
        %v385 = vadd.f32 %v382, 1.0
        %v386 = vadd.f32 %v384, 1.0
        %v387 = vrcp.pop %v385
        %v388 = vmul.f32 1.0, %v387
        %v389 = vrcp.pop %v386
        %v390 = vmul.f32 1.0, %v389
        %v391 = vmul.f32 %v268, %v388
        %v392 = vmul.f32 %v269, %v390
        %v393 = vmul.f32 %v270, %v388
        %v394 = vmul.f32 %v271, %v390
        %395 = vst [vmem:[%s261] sm:$0xff] %v391
        %396 = vst [vmem:[%s261 + $0x8] sm:$0xff] %v392
        %397 = vst [vmem:[%s261 + $0x10] sm:$0xff] %v393
        %398 = vst [vmem:[%s261 + $0x18] sm:$0xff] %v394
        %s399 = sand.u32 %s157, 1
        %s400 = scalar_lea.sflag [#allocation5], %s399
        %s401 = sand.u32 %s157, 1
        %s402 = smul.addr %s401, 32
        %s403 = scalar_lea.vmem [#allocation6], %s402
        // Predicated region
        $region45: #{tpu_custom_call.1} parent=39 // pred_check
          %p404 = pneg %p167
        $region46: #{tpu_custom_call.1} parent=39 // pred_check_branch
          %406 = sbr.rel (%p404) target = $region48
        $region47: #{tpu_custom_call.1} parent=39 // pred_region
          %s407 = smul.u32 2, %s28
          %s409 = ssub.s32 512, 512
          %410 = vsyncadd %s400, %s409
          %s411 = smul.addr %s27, 4
          %s412 = sadd.s32 %s407, %s411
          %s413 = smul.addr %s412, 128
          %s414 = scalar_lea.hbm %s5, %s413
          %s415 = sshll.u32 %s403, 4
          %s416 = int_to_ptr.vmem [resolvable:$true] %s415
          %421 = dma.vmem_to_hbm [thread:$0]  %s416, 512, %s414, %s400, 256, 256, 16
        $region48: #{tpu_custom_call.1} parent=39 // pred_fallthru
          _
      $region40: #{tpu_custom_call.1} parent=5 // pred_fallthru
        _
      %p422 = scmp.le.s32.totalorder 2, %s18
      // Predicated region
      $region49: #{tpu_custom_call.1} parent=5 // pred_check
        %p423 = pneg %p422
      $region50: #{tpu_custom_call.1} parent=5 // pred_check_branch
        %425 = sbr.rel (%p423) target = $region52
      $region51: #{tpu_custom_call.1} parent=5 // pred_region
        %s426 = ssub.s32 %s18, 2
        // Predicated region
        $region53: #{tpu_custom_call.1} parent=51 // pred_check
          %p427 = pneg %p173
        $region54: #{tpu_custom_call.1} parent=51 // pred_check_branch
          %429 = sbr.rel (%p427) target = $region56
        $region55: #{tpu_custom_call.1} parent=51 // pred_region
          %s430 = sand.u32 %s158, 1
          %s431 = scalar_lea.sflag [#allocation5], %s430
          %s432 = sand.u32 %s158, 1
          %s433 = smul.addr %s432, 32
          %s434 = scalar_lea.vmem [#allocation6], %s433
          %435 = dma.done %s431, 512
        $region56: #{tpu_custom_call.1} parent=51 // pred_fallthru
          _
      $region52: #{tpu_custom_call.1} parent=5 // pred_fallthru
        _
    $region6: #{tpu_custom_call.1} parent=1 // loop_footer
      %s22 = sadd.s32 1, %s18
    $region7: #{tpu_custom_call.1} parent=1 // loop_footer_branch
      %17 = sbr.rel target = $region3
    $region8: #{tpu_custom_call.1} parent=1 // loop_exit
      _
    %436 = vsyncpa [#allocation4], 1
    %s437 = scalar_lea.sflag [#allocation4], 1
    %438 = vsyncpa %s437, 1
    %439 = vsyncpa [#allocation5], 1
    %s440 = scalar_lea.sflag [#allocation5], 1
    %441 = vsyncpa %s440, 1

</llo_original>
